<compile_context>
chip_gen: v7x
topology: tpu7x:2x2x1
jax: 0.10.0
libtpu: 0.0.40
codegen_flags: <defaults>
</compile_context>

<pallas_src>
import jax
import jax.numpy as jnp
from jax.experimental import pallas as pl
from jax.experimental.pallas import tpu as pltpu


def _round_up(x: int, m: int) -> int:
    return ((x + m - 1) // m) * m


def _make_kernel(resident_w: bool, tn: int, hp: int):
    def kernel(x_ref, w_ref, b_ref, m_ref, out_ref, carry_ref):
        l = pl.program_id(1)
        n = pl.program_id(2)
        num_layers = pl.num_programs(1)

        read_slot = jax.lax.rem(l, 2)
        write_slot = 1 - read_slot

        # Seed the per-row-tile carry with the raw input exactly once
        # (l == 0, n == 0); avoids the old dual-tile select on every layer.
        @pl.when(jnp.logical_and(l == 0, n == 0))
        def _():
            carry_ref[0] = x_ref[...]

        # input_dropout(p=0.0) between layers -> identity (no-op).
        x = carry_ref[read_slot]                               # (TM, Hp) bf16

        if resident_w:
            w = w_ref[l]                                       # (Hp, Hp) bf16
            b = b_ref[l]                                       # (1, Hp)  f32
        else:
            w = w_ref[0]                                       # (Hp, TN) bf16
            b = b_ref[0]                                       # (1, TN)  f32

        # MXU matmul in bf16 with f32 accumulation; f32 epilogue on the VPU.
        h = jnp.dot(x, w, preferred_element_type=jnp.float32)  # (TM, TN) f32
        h = jnp.maximum(h + b, 0.0)                            # bias + relu
        h = h * m_ref[...]                                     # sequence mask
        hb = h.astype(jnp.bfloat16)                            # single cast

        if jnp.dtype(out_ref.dtype) == jnp.dtype(jnp.bfloat16):
            out_ref[0] = hb
        else:
            out_ref[0] = h.astype(out_ref.dtype)

        # Last layer's output is never consumed again -> skip the carry write.
        @pl.when(l < num_layers - 1)
        def _():
            if tn == hp:                     # single column tile: full-width store
                carry_ref[write_slot] = hb
            else:                            # N-tiled streaming path (large Hp)
                col0 = pl.multiple_of(n * tn, tn)
                carry_ref[write_slot, :, pl.ds(col0, tn)] = hb

    return kernel


def stacked_encoder_forward(x, mask, weights, biases, *, out_dtype=jnp.bfloat16):
    """x: (B, S, H) float, mask: (B, S) int or None, weights: (L, H, H), biases: (L, H).

    Returns (enc_output, layered_output) matching the PyTorch module:
      enc_output:     (B, S, H)   -- last layer output
      layered_output: list of L arrays, each (B, S, H)
    Outputs are bf16 by default (accuracy is already bf16-limited by the MXU
    operands and inter-layer carry; bf16 halves the dominant HBM writeback).
    """
    B, S, H = x.shape
    L = weights.shape[0]
    BS = B * S
    if mask is None:
        mask = jnp.ones((B, S), dtype=jnp.int32)

    f32, bf16 = jnp.float32, jnp.bfloat16
    out_itemsize = jnp.dtype(out_dtype).itemsize

    # Lane-dense hidden dim: pad to a multiple of 128 (TPU lane width).
    Hp = max(_round_up(H, 128), 128)

    # ---- generation-aware VMEM budgeting ---------------------------------
    try:
        vmem_cap = int(pltpu.get_tpu_info().vmem_capacity_bytes)
    except Exception:
        vmem_cap = 64 << 20          # conservative (v7x-sized) fallback
    budget = (vmem_cap * 3) // 4     # ~96 MiB on v5e/v6e, ~48 MiB on v7x

    # Weights stay VMEM-resident (single-buffered) when they fit comfortably:
    # up to ~48 MiB on 128 MiB parts, ~24 MiB on v7x's 64 MiB.
    w_bytes = L * Hp * Hp * 2
    resident_w = w_bytes <= min((vmem_cap * 3) // 8, 48 << 20)

    # Row tile: big on 128 MiB parts to amortize per-step overhead, moderate
    # on v7x; keep >=2 row tiles when BS allows so both v7x TCs get work.
    tm_target = 2048 if vmem_cap >= (96 << 20) else 1024
    TM = max(16, min(tm_target, _round_up(BS, 16)))
    if BS > 16:
        TM = min(TM, _round_up(-(-BS // 2), 16))

    def vmem_estimate(tm, tn, w_buf_mult=1):
        est = 2 * tm * Hp * 2                       # x rows (bf16, double-buffered)
        est += 2 * tm * 128 * 4                     # mask rows (lane-padded f32, x2)
        if resident_w:
            est += w_buf_mult * (L * Hp * Hp * 2 + L * 8 * Hp * 4)
        else:
            est += 2 * (Hp * tn * 2 + 8 * tn * 4)   # streamed layer col-tile, x2
        est += 2 * tm * tn * out_itemsize           # output tile (double-buffered)
        est += 2 * tm * Hp * 2                      # ping-pong bf16 carry scratch
        return est

    # Column tile over the weight output dimension. Full width whenever it
    # fits; otherwise the largest 128-multiple divisor of Hp that does
    # (streaming large-Hp guard -- keeps the kernel valid on v7x at Hp>=2048).
    TN = Hp
    if not resident_w and vmem_estimate(TM, TN) > budget:
        k = Hp // 128
        TN = 128
        for d in range(k, 0, -1):
            if k % d == 0 and vmem_estimate(TM, 128 * d) <= budget:
                TN = 128 * d
                break
    # If still over budget, shrink the row tile.
    while vmem_estimate(TM, TN) > budget and TM > 16:
        TM = max(16, _round_up(TM // 2, 16))

    BSp = _round_up(BS, TM)
    n_row_tiles = BSp // TM
    n_col_tiles = Hp // TN

    def _vmem_limit(single_buffer_resident: bool) -> int:
        est = vmem_estimate(TM, TN, 1 if single_buffer_resident else 2)
        # Never undercut the real estimate; +8 MiB headroom, capped near the
        # physical capacity of the current generation.
        return int(min(est + (8 << 20), max(vmem_cap - (8 << 20), est)))

    # ---- stage inputs (skip zero-pad copies when shapes already align) ----
    x2 = x.reshape(BS, H).astype(bf16)
    m2 = mask.reshape(BS, 1).astype(f32)
    if Hp != H or BSp != BS:
        # Zero padding is semantics-preserving: padded W rows/cols and padded
        # bias are zero, so padded hidden lanes stay exactly 0 through relu.
        x_flat = jnp.zeros((BSp, Hp), bf16).at[:BS, :H].set(x2)
        mask_flat = jnp.zeros((BSp, 1), f32).at[:BS, :].set(m2)
    else:
        x_flat, mask_flat = x2, m2
    if Hp != H:
        w_p = jnp.zeros((L, Hp, Hp), bf16).at[:, :H, :H].set(weights.astype(bf16))
        b_p = jnp.zeros((L, 1, Hp), f32).at[:, 0, :H].set(biases.astype(f32))
    else:
        w_p = weights.astype(bf16)
        b_p = biases.astype(f32).reshape(L, 1, Hp)

    # ---- pallas_call builder ---------------------------------------------
    def _build(single_buffer_resident: bool):
        if resident_w:
            extra = ({"pipeline_mode": pl.Buffered(1)}
                     if single_buffer_resident else {})
            w_spec = pl.BlockSpec((L, Hp, Hp), lambda i, l, n: (0, 0, 0), **extra)
            b_spec = pl.BlockSpec((L, 1, Hp), lambda i, l, n: (0, 0, 0), **extra)
        else:
            w_spec = pl.BlockSpec((1, Hp, TN), lambda i, l, n: (l, 0, n))
            b_spec = pl.BlockSpec((1, 1, TN), lambda i, l, n: (l, 0, n))

        return pl.pallas_call(
            _make_kernel(resident_w, TN, Hp),
            out_shape=jax.ShapeDtypeStruct((L, BSp, Hp), out_dtype),
            grid_spec=pltpu.PrefetchScalarGridSpec(
                num_scalar_prefetch=0,
                grid=(n_row_tiles, L, n_col_tiles),
                in_specs=[
                    pl.BlockSpec((TM, Hp), lambda i, l, n: (i, 0)),   # input rows (bf16)
                    w_spec,                                           # W (bf16)
                    b_spec,                                           # b (f32)
                    pl.BlockSpec((TM, 1), lambda i, l, n: (i, 0)),    # mask rows (f32)
                ],
                out_specs=pl.BlockSpec((1, TM, TN), lambda i, l, n: (l, i, n)),
                scratch_shapes=[pltpu.VMEM((2, TM, Hp), jnp.bfloat16)],
            ),
            compiler_params=pltpu.CompilerParams(
                dimension_semantics=("parallel", "arbitrary", "arbitrary"),
                vmem_limit_bytes=_vmem_limit(single_buffer_resident),
            ),
        )

    try:
        layered_p = _build(True)(x_flat, w_p, b_p, mask_flat)
    except Exception:
        if not resident_w:
            raise
        # Fallback: retry with default double-buffered resident weights in
        # case single-buffered (pl.Buffered(1)) blocks are rejected.
        layered_p = _build(False)(x_flat, w_p, b_p, mask_flat)

    # Trim wrapper-side traffic: slice only when padded, no extra f32 cast.
    layered = layered_p
    if BSp != BS or Hp != H:
        layered = layered[:, :BS, :H]
    layered = layered.reshape(L, B, S, H)
    layered_output = [layered[i] for i in range(L)]
    enc_output = layered_output[-1]
    return enc_output, layered_output


def _reference_forward(x, mask, weights, biases):
    """Pure-JAX f32 reference reproducing the PyTorch semantics."""
    last = x.astype(jnp.float32)
    m = mask.astype(jnp.float32)[..., None]
    outs = []
    for i in range(weights.shape[0]):
        # dropout(p=0.0) -> identity
        last = jnp.maximum(
            jnp.einsum("bsh,hk->bsk", last, weights[i]) + biases[i], 0.0) * m
        outs.append(last)
    return outs[-1], outs


if __name__ == "__main__":
    # Small shapes consistent with the module: batch=2, seq=8, hidden=32, 3 layers.
    B, S, H, L = 2, 8, 32, 3

    key = jax.random.PRNGKey(0)
    k_x, k_w, k_b, k_m = jax.random.split(key, 4)

    x = jax.random.normal(k_x, (B, S, H), dtype=jnp.float32)
    weights = 0.1 * jax.random.normal(k_w, (L, H, H), dtype=jnp.float32)
    biases = 0.05 * jax.random.normal(k_b, (L, H), dtype=jnp.float32)
    # LongTensor-style 0/1 mask over the sequence.
    mask = (jax.random.uniform(k_m, (B, S)) > 0.2).astype(jnp.int32)

    enc_out, layered = stacked_encoder_forward(x, mask, weights, biases)
    enc_out = jax.block_until_ready(enc_out)
    layered = [jax.block_until_ready(y) for y in layered]

    ref_out, ref_layered = _reference_forward(x, mask, weights, biases)
    assert len(layered) == L
    # bf16 MXU operands / carry / output -> loosened tolerance vs f32 reference.
    for got, want in zip(layered, ref_layered):
        assert jnp.allclose(got.astype(jnp.float32), want, atol=3e-2, rtol=3e-2)
    assert jnp.allclose(enc_out.astype(jnp.float32), ref_out, atol=3e-2, rtol=3e-2)

    print("KERNEL_OK")
</pallas_src>

<mosaic_0001>
module attributes {stable_mosaic.version = 11 : i64} {
  func.func @kernel(%arg0: i32, %arg1: i32, %arg2: i32, %arg3: memref<16x128xbf16, #tpu.memory_space<vmem>>, %arg4: memref<3x128x128xbf16, #tpu.memory_space<vmem>>, %arg5: memref<3x1x128xf32, #tpu.memory_space<vmem>>, %arg6: memref<16x1xf32, #tpu.memory_space<vmem>>, %arg7: memref<1x16x128xbf16, #tpu.memory_space<vmem>>, %arg8: memref<2x16x128xbf16, #tpu.memory_space<vmem>>) attributes {dimension_semantics = [#tpu.dimension_semantics<parallel>, #tpu.dimension_semantics<arbitrary>, #tpu.dimension_semantics<arbitrary>], iteration_bounds = array<i64: 1, 3, 1>, scalar_prefetch = 0 : i64, scratch_operands = 1 : i64, tpu.core_type = #tpu.core_type<tc>, window_params = [{transform_indices = @transform_0, window_bounds = array<i64: 16, 128>}, {pipeline_mode = #tpu.pipeline_mode<synchronous>, transform_indices = @transform_1, window_bounds = array<i64: 3, 128, 128>}, {pipeline_mode = #tpu.pipeline_mode<synchronous>, transform_indices = @transform_2, window_bounds = array<i64: 3, 1, 128>}, {transform_indices = @transform_3, window_bounds = array<i64: 16, 1>}, {transform_indices = @transform_4, window_bounds = array<i64: 1, 16, 128>}]} {
    %c2_i32 = arith.constant 2 : i32
    %0 = arith.remsi %arg1, %c2_i32 : i32
    %c1_i32 = arith.constant 1 : i32
    %1 = arith.subi %c1_i32, %0 : i32
    %c0_i32 = arith.constant 0 : i32
    %2 = arith.cmpi eq, %arg1, %c0_i32 : i32
    %c0_i32_0 = arith.constant 0 : i32
    %3 = arith.cmpi eq, %arg2, %c0_i32_0 : i32
    %4 = arith.andi %2, %3 : i1
    %5 = arith.extui %4 : i1 to i32
    %c0_i32_1 = arith.constant 0 : i32
    %6 = arith.cmpi ne, %5, %c0_i32_1 : i32
    scf.if %6 {
      %c0_15 = arith.constant 0 : index
      %c0_16 = arith.constant 0 : index
      %31 = vector.load %arg3[%c0_15, %c0_16] : memref<16x128xbf16, #tpu.memory_space<vmem>>, vector<16x128xbf16>
      %c0_17 = arith.constant 0 : index
      %c0_18 = arith.constant 0 : index
      %c0_19 = arith.constant 0 : index
      %32 = vector.load %arg8[%c0_17, %c0_18, %c0_19] : memref<2x16x128xbf16, #tpu.memory_space<vmem>>, vector<1x16x128xbf16>
      %33 = vector.shape_cast %32 : vector<1x16x128xbf16> to vector<16x128xbf16>
      %34 = vector.shape_cast %31 : vector<16x128xbf16> to vector<1x16x128xbf16>
      tpu.vector_store %arg8[%c0_17, %c0_18, %c0_19], %34 {strides = array<i32>} : memref<2x16x128xbf16, #tpu.memory_space<vmem>>, vector<1x16x128xbf16>,
    } else {
    }
    %7 = arith.index_cast %0 : i32 to index
    %c0 = arith.constant 0 : index
    %c0_2 = arith.constant 0 : index
    %8 = vector.load %arg8[%7, %c0, %c0_2] : memref<2x16x128xbf16, #tpu.memory_space<vmem>>, vector<1x16x128xbf16>
    %9 = vector.shape_cast %8 : vector<1x16x128xbf16> to vector<16x128xbf16>
    %10 = arith.index_cast %arg1 : i32 to index
    %c0_3 = arith.constant 0 : index
    %c0_4 = arith.constant 0 : index
    %11 = vector.load %arg4[%10, %c0_3, %c0_4] : memref<3x128x128xbf16, #tpu.memory_space<vmem>>, vector<1x128x128xbf16>
    %12 = vector.shape_cast %11 : vector<1x128x128xbf16> to vector<128x128xbf16>
    %13 = arith.index_cast %arg1 : i32 to index
    %c0_5 = arith.constant 0 : index
    %c0_6 = arith.constant 0 : index
    %14 = vector.load %arg5[%13, %c0_5, %c0_6] : memref<3x1x128xf32, #tpu.memory_space<vmem>>, vector<1x1x128xf32>
    %15 = vector.shape_cast %14 : vector<1x1x128xf32> to vector<1x128xf32>
    %cst = arith.constant dense<0.000000e+00> : vector<16x128xf32>
    %16 = tpu.matmul %9, %12, %cst {dimension_numbers = #tpu.dot_dimension_numbers<[1], [0], [0], [1], [0, 0, 1, 1], [], []>} : vector<16x128xbf16>, vector<128x128xbf16>, vector<16x128xf32> -> vector<16x128xf32>
    %17 = vector.broadcast %15 : vector<1x128xf32> to vector<16x128xf32>
    %18 = arith.addf %16, %17 : vector<16x128xf32>
    %cst_7 = arith.constant 0.000000e+00 : f32
    %19 = vector.broadcast %cst_7 : f32 to vector<16x128xf32>
    %20 = arith.maximumf %18, %19 : vector<16x128xf32>
    %c0_8 = arith.constant 0 : index
    %c0_9 = arith.constant 0 : index
    %21 = vector.load %arg6[%c0_8, %c0_9] : memref<16x1xf32, #tpu.memory_space<vmem>>, vector<16x1xf32>
    %22 = vector.broadcast %21 : vector<16x1xf32> to vector<16x128xf32>
    %23 = arith.mulf %20, %22 : vector<16x128xf32>
    %24 = arith.truncf %23 : vector<16x128xf32> to vector<16x128xbf16>
    %c0_10 = arith.constant 0 : index
    %c0_11 = arith.constant 0 : index
    %c0_12 = arith.constant 0 : index
    %25 = vector.load %arg7[%c0_10, %c0_11, %c0_12] : memref<1x16x128xbf16, #tpu.memory_space<vmem>>, vector<1x16x128xbf16>
    %26 = vector.shape_cast %25 : vector<1x16x128xbf16> to vector<16x128xbf16>
    %27 = vector.shape_cast %24 : vector<16x128xbf16> to vector<1x16x128xbf16>
    tpu.vector_store %arg7[%c0_10, %c0_11, %c0_12], %27 {strides = array<i32>} : memref<1x16x128xbf16, #tpu.memory_space<vmem>>, vector<1x16x128xbf16>,
    %c2_i32_13 = arith.constant 2 : i32
    %28 = arith.cmpi slt, %arg1, %c2_i32_13 : i32
    %29 = arith.extui %28 : i1 to i32
    %c0_i32_14 = arith.constant 0 : i32
    %30 = arith.cmpi ne, %29, %c0_i32_14 : i32
    scf.if %30 {
      %31 = arith.index_cast %1 : i32 to index
      %c0_15 = arith.constant 0 : index
      %c0_16 = arith.constant 0 : index
      %32 = vector.load %arg8[%31, %c0_15, %c0_16] : memref<2x16x128xbf16, #tpu.memory_space<vmem>>, vector<1x16x128xbf16>
      %33 = vector.shape_cast %32 : vector<1x16x128xbf16> to vector<16x128xbf16>
      %34 = vector.shape_cast %24 : vector<16x128xbf16> to vector<1x16x128xbf16>
      tpu.vector_store %arg8[%31, %c0_15, %c0_16], %34 {strides = array<i32>} : memref<2x16x128xbf16, #tpu.memory_space<vmem>>, vector<1x16x128xbf16>,
    } else {
    }
    return
  }
  func.func @transform_0(%arg0: i32, %arg1: i32, %arg2: i32) -> (i32, i32) {
    %c0_i32 = arith.constant 0 : i32
    %c0_i32_0 = arith.constant 0 : i32
    return %arg0, %c0_i32 : i32, i32
  }
  func.func @transform_1(%arg0: i32, %arg1: i32, %arg2: i32) -> (i32, i32, i32) {
    %c0_i32 = arith.constant 0 : i32
    %c0_i32_0 = arith.constant 0 : i32
    %c0_i32_1 = arith.constant 0 : i32
    %c0_i32_2 = arith.constant 0 : i32
    return %c0_i32, %c0_i32_0, %c0_i32_1 : i32, i32, i32
  }
  func.func @transform_2(%arg0: i32, %arg1: i32, %arg2: i32) -> (i32, i32, i32) {
    %c0_i32 = arith.constant 0 : i32
    %c0_i32_0 = arith.constant 0 : i32
    %c0_i32_1 = arith.constant 0 : i32
    %c0_i32_2 = arith.constant 0 : i32
    return %c0_i32, %c0_i32_0, %c0_i32_1 : i32, i32, i32
  }
  func.func @transform_3(%arg0: i32, %arg1: i32, %arg2: i32) -> (i32, i32) {
    %c0_i32 = arith.constant 0 : i32
    %c0_i32_0 = arith.constant 0 : i32
    return %arg0, %c0_i32 : i32, i32
  }
  func.func @transform_4(%arg0: i32, %arg1: i32, %arg2: i32) -> (i32, i32, i32) {
    %c0_i32 = arith.constant 0 : i32
    return %arg1, %arg0, %arg2 : i32, i32, i32
  }
}

module attributes {stable_mosaic.version = 11 : i64} {
  func.func @kernel(%arg0: i32, %arg1: i32, %arg2: i32, %arg3: memref<16x128xbf16, #tpu.memory_space<vmem>>, %arg4: memref<3x128x128xbf16, #tpu.memory_space<vmem>>, %arg5: memref<3x1x128xf32, #tpu.memory_space<vmem>>, %arg6: memref<16x1xf32, #tpu.memory_space<vmem>>, %arg7: memref<1x16x128xbf16, #tpu.memory_space<vmem>>, %arg8: memref<2x16x128xbf16, #tpu.memory_space<vmem>>) attributes {dimension_semantics = [#tpu.dimension_semantics<parallel>, #tpu.dimension_semantics<arbitrary>, #tpu.dimension_semantics<arbitrary>], iteration_bounds = array<i64: 1, 3, 1>, scalar_prefetch = 0 : i64, scratch_operands = 1 : i64, tpu.core_type = #tpu.core_type<tc>, window_params = [{transform_indices = @transform_0, window_bounds = array<i64: 16, 128>}, {pipeline_mode = #tpu.pipeline_mode<synchronous>, transform_indices = @transform_1, window_bounds = array<i64: 3, 128, 128>}, {pipeline_mode = #tpu.pipeline_mode<synchronous>, transform_indices = @transform_2, window_bounds = array<i64: 3, 1, 128>}, {transform_indices = @transform_3, window_bounds = array<i64: 16, 1>}, {transform_indices = @transform_4, window_bounds = array<i64: 1, 16, 128>}]} {
    %c2_i32 = arith.constant 2 : i32
    %0 = arith.remsi %arg1, %c2_i32 : i32
    %c1_i32 = arith.constant 1 : i32
    %1 = arith.subi %c1_i32, %0 : i32
    %c0_i32 = arith.constant 0 : i32
    %2 = arith.cmpi eq, %arg1, %c0_i32 : i32
    %c0_i32_0 = arith.constant 0 : i32
    %3 = arith.cmpi eq, %arg2, %c0_i32_0 : i32
    %4 = arith.andi %2, %3 : i1
    %5 = arith.extui %4 : i1 to i32
    %c0_i32_1 = arith.constant 0 : i32
    %6 = arith.cmpi ne, %5, %c0_i32_1 : i32
    scf.if %6 {
      %c0_15 = arith.constant 0 : index
      %c0_16 = arith.constant 0 : index
      %31 = vector.load %arg3[%c0_15, %c0_16] : memref<16x128xbf16, #tpu.memory_space<vmem>>, vector<16x128xbf16>
      %c0_17 = arith.constant 0 : index
      %c0_18 = arith.constant 0 : index
      %c0_19 = arith.constant 0 : index
      %32 = vector.load %arg8[%c0_17, %c0_18, %c0_19] : memref<2x16x128xbf16, #tpu.memory_space<vmem>>, vector<1x16x128xbf16>
      %33 = vector.shape_cast %32 : vector<1x16x128xbf16> to vector<16x128xbf16>
      %34 = vector.shape_cast %31 : vector<16x128xbf16> to vector<1x16x128xbf16>
      tpu.vector_store %arg8[%c0_17, %c0_18, %c0_19], %34 {strides = array<i32>} : memref<2x16x128xbf16, #tpu.memory_space<vmem>>, vector<1x16x128xbf16>,
    } else {
    }
    %7 = arith.index_cast %0 : i32 to index
    %c0 = arith.constant 0 : index
    %c0_2 = arith.constant 0 : index
    %8 = vector.load %arg8[%7, %c0, %c0_2] : memref<2x16x128xbf16, #tpu.memory_space<vmem>>, vector<1x16x128xbf16>
    %9 = vector.shape_cast %8 : vector<1x16x128xbf16> to vector<16x128xbf16>
    %10 = arith.index_cast %arg1 : i32 to index
    %c0_3 = arith.constant 0 : index
    %c0_4 = arith.constant 0 : index
    %11 = vector.load %arg4[%10, %c0_3, %c0_4] : memref<3x128x128xbf16, #tpu.memory_space<vmem>>, vector<1x128x128xbf16>
    %12 = vector.shape_cast %11 : vector<1x128x128xbf16> to vector<128x128xbf16>
    %13 = arith.index_cast %arg1 : i32 to index
    %c0_5 = arith.constant 0 : index
    %c0_6 = arith.constant 0 : index
    %14 = vector.load %arg5[%13, %c0_5, %c0_6] : memref<3x1x128xf32, #tpu.memory_space<vmem>>, vector<1x1x128xf32>
    %15 = vector.shape_cast %14 : vector<1x1x128xf32> to vector<1x128xf32>
    %cst = arith.constant dense<0.000000e+00> : vector<16x128xf32>
    %16 = tpu.matmul %9, %12, %cst {dimension_numbers = #tpu.dot_dimension_numbers<[1], [0], [0], [1], [0, 0, 1, 1], [], []>} : vector<16x128xbf16>, vector<128x128xbf16>, vector<16x128xf32> -> vector<16x128xf32>
    %17 = vector.broadcast %15 : vector<1x128xf32> to vector<16x128xf32>
    %18 = arith.addf %16, %17 : vector<16x128xf32>
    %cst_7 = arith.constant 0.000000e+00 : f32
    %19 = vector.broadcast %cst_7 : f32 to vector<16x128xf32>
    %20 = arith.maximumf %18, %19 : vector<16x128xf32>
    %c0_8 = arith.constant 0 : index
    %c0_9 = arith.constant 0 : index
    %21 = vector.load %arg6[%c0_8, %c0_9] : memref<16x1xf32, #tpu.memory_space<vmem>>, vector<16x1xf32>
    %22 = vector.broadcast %21 : vector<16x1xf32> to vector<16x128xf32>
    %23 = arith.mulf %20, %22 : vector<16x128xf32>
    %24 = arith.truncf %23 : vector<16x128xf32> to vector<16x128xbf16>
    %c0_10 = arith.constant 0 : index
    %c0_11 = arith.constant 0 : index
    %c0_12 = arith.constant 0 : index
    %25 = vector.load %arg7[%c0_10, %c0_11, %c0_12] : memref<1x16x128xbf16, #tpu.memory_space<vmem>>, vector<1x16x128xbf16>
    %26 = vector.shape_cast %25 : vector<1x16x128xbf16> to vector<16x128xbf16>
    %27 = vector.shape_cast %24 : vector<16x128xbf16> to vector<1x16x128xbf16>
    tpu.vector_store %arg7[%c0_10, %c0_11, %c0_12], %27 {strides = array<i32>} : memref<1x16x128xbf16, #tpu.memory_space<vmem>>, vector<1x16x128xbf16>,
    %c2_i32_13 = arith.constant 2 : i32
    %28 = arith.cmpi slt, %arg1, %c2_i32_13 : i32
    %29 = arith.extui %28 : i1 to i32
    %c0_i32_14 = arith.constant 0 : i32
    %30 = arith.cmpi ne, %29, %c0_i32_14 : i32
    scf.if %30 {
      %31 = arith.index_cast %1 : i32 to index
      %c0_15 = arith.constant 0 : index
      %c0_16 = arith.constant 0 : index
      %32 = vector.load %arg8[%31, %c0_15, %c0_16] : memref<2x16x128xbf16, #tpu.memory_space<vmem>>, vector<1x16x128xbf16>
      %33 = vector.shape_cast %32 : vector<1x16x128xbf16> to vector<16x128xbf16>
      %34 = vector.shape_cast %24 : vector<16x128xbf16> to vector<1x16x128xbf16>
      tpu.vector_store %arg8[%31, %c0_15, %c0_16], %34 {strides = array<i32>} : memref<2x16x128xbf16, #tpu.memory_space<vmem>>, vector<1x16x128xbf16>,
    } else {
    }
    return
  }
  func.func @transform_0(%arg0: i32, %arg1: i32, %arg2: i32) -> (i32, i32) {
    %c0_i32 = arith.constant 0 : i32
    %c0_i32_0 = arith.constant 0 : i32
    return %arg0, %c0_i32 : i32, i32
  }
  func.func @transform_1(%arg0: i32, %arg1: i32, %arg2: i32) -> (i32, i32, i32) {
    %c0_i32 = arith.constant 0 : i32
    %c0_i32_0 = arith.constant 0 : i32
    %c0_i32_1 = arith.constant 0 : i32
    %c0_i32_2 = arith.constant 0 : i32
    return %c0_i32, %c0_i32_0, %c0_i32_1 : i32, i32, i32
  }
  func.func @transform_2(%arg0: i32, %arg1: i32, %arg2: i32) -> (i32, i32, i32) {
    %c0_i32 = arith.constant 0 : i32
    %c0_i32_0 = arith.constant 0 : i32
    %c0_i32_1 = arith.constant 0 : i32
    %c0_i32_2 = arith.constant 0 : i32
    return %c0_i32, %c0_i32_0, %c0_i32_1 : i32, i32, i32
  }
  func.func @transform_3(%arg0: i32, %arg1: i32, %arg2: i32) -> (i32, i32) {
    %c0_i32 = arith.constant 0 : i32
    %c0_i32_0 = arith.constant 0 : i32
    return %arg0, %c0_i32 : i32, i32
  }
  func.func @transform_4(%arg0: i32, %arg1: i32, %arg2: i32) -> (i32, i32, i32) {
    %c0_i32 = arith.constant 0 : i32
    return %arg1, %arg0, %arg2 : i32, i32, i32
  }
}

</mosaic_0001>

<llo_original>
// kernel: tpu_custom_call.1
$region0: #{tpu_custom_call.1}
  #allocation0 [shape = 'u32[]', space=smem, size = 0x4, offset = 0x4, fixed_abs, tag = 'smem constant byte address 0x4 - core index']
  #allocation1 [shape = 'u32[144,128]{1,0:T(1,128)}', space=vmem, size = 0x12000, scoped, tag = 'internal scratch']
  #allocation2 [shape = 'bf16[2,16,128]{2,1,0:T(16,128)(2,1)}', space=vmem, size = 0x2000, scoped, tag = 'scratch operand']
  %s0 = inlined_call_operand.vmem [shape: bf16[16,128], index: 0, kind: input, shape index: {}]
  %s1 = inlined_call_operand.hbm [shape: bf16[3,128,128], index: 1, kind: input, shape index: {}]
  %s2 = inlined_call_operand.vmem [shape: f32[3,1,128], index: 2, kind: input, shape index: {}]
  %s3 = inlined_call_operand.vmem [shape: f32[16,1], index: 3, kind: input, shape index: {}]
  %s4 = inlined_call_operand.hbm [shape: bf16[3,16,128], index: 4, kind: output, shape index: {}]
  %s5 = sld [smem:[#allocation0]]
  $region61: #{tpu_custom_call.1} parent=0
    _
  %s7 = ssub.s32 1, %s5
  %s8 = scalar_select 0, %s7, %s5
  $region1: #{tpu_custom_call.1} parent=0
    #allocation3 [shape = 'u8[98304]{0}', space=vmem, size = 0x18000, scoped, tag = 'input window, operand 1, single buffered']
    #allocation4 [shape = 's32[2]{0}', space=sflag, size = 0x8, scoped, tag = 'scoped memory for tpu_custom_call.1']
    #allocation5 [shape = 's32[2]{0}', space=sflag, size = 0x8, scoped, tag = 'scoped memory for tpu_custom_call.1']
    #allocation6 [shape = 'u8[8192]{0}', space=vmem, size = 0x2000, scoped, tag = 'output window, operand 0']
    %9 = vsyncpa [#allocation4], 0
    %10 = vsyncpa [#allocation5], 0
    %s11 = scalar_lea.sflag [#allocation5], 1
    %12 = vsyncpa %s11, 0
    loop: start=0, step=1, limit=5
    $region2: #{tpu_custom_call.1} parent=1 // loop_pre_header
      _
    $region3: #{tpu_custom_call.1} parent=1 // loop_header
      %s14 = sphi 0, %s18
      %p15 = scmp.ge.s32.totalorder %s14, 5
      %s21 = sphi 0, %s40
      %s22 = sphi 0, %s36
      %s23 = sphi 0, %s32
      %s24 = sphi 0, %s21
      %s25 = sphi 0, %s22
      %s26 = sphi 0, %s23
      %s27 = sphi 0, %s24
      %s28 = sphi 0, %s25
      %s29 = sphi 0, %s26
      %s43 = sphi 0, %s45
      %s46 = sphi 0, %s43
      %s47 = sphi 0, %s46
      %s63 = sphi 0, %s47
      %s67 = sphi 0, %s67
      %s69 = sphi 0, %s67
      %s70 = sphi 0, %s69
      %s84 = sphi 0, %s70
      %s88 = sphi 0, %s88
      %s90 = sphi 0, %s88
      %s91 = sphi 0, %s90
      %s105 = sphi 0, %s91
      %s111 = sphi 0, %s113
      %s114 = sphi 0, %s111
      %s115 = sphi 0, %s114
      %s131 = sphi 0, %s115
      %s141 = sphi 0, %s143
      %s144 = sphi 0, %s141
      %s145 = sphi 0, %s144
      %s161 = sphi 0, %s145
    $region4: #{tpu_custom_call.1} parent=1 // loop_header_branch
      %17 = sbr.rel (%p15) target = $region8
    $region5: #{tpu_custom_call.1} parent=1 // loop_body
      %s19 = ssub.s32 %s14, 1
      %s20 = ssub.s32 %s14, 2
      %s30 = sadd.s32 1, %s23
      %p31 = scmp.ge.s32.totalorder %s30, 1
      %s32 = scalar_select %p31, 0, %s30
      %s33 = sadd.s32 1, %s22
      %s34 = scalar_select %p31, %s33, %s22
      %p35 = scmp.ge.s32.totalorder %s34, 3
      %s36 = scalar_select %p35, 0, %s34
      %s37 = sadd.s32 1, %s21
      %s38 = scalar_select %p35, %s37, %s21
      %p39 = scmp.ge.s32.totalorder %s38, 1
      %s40 = scalar_select %p39, 0, %s38
      %s41 = ssub.s32 %s21, %s40
      %p42 = scmp.eq.s32.totalorder %s41, 0
      %s44 = sadd.s32 %s43, 1
      %s45 = scalar_select %p42, %s43, %s44
      %p48 = pneg %p42
      %p49 = scmp.eq.s32.totalorder %s14, 2
      %p50 = por %p48, %p49
      %p51 = scmp.ne.s32.totalorder %s43, %s46
      %p52 = scmp.eq.s32.totalorder %s14, 0
      %p53 = por %p51, %p52
      %p54 = scmp.ne.s32.totalorder %s43, %s46
      %p55 = scmp.eq.s32.totalorder %s19, 2
      %p56 = por %p54, %p55
      %p57 = scmp.ne.s32.totalorder %s46, %s47
      %p58 = scmp.eq.s32.totalorder %s19, 0
      %p59 = por %p57, %p58
      %p60 = scmp.ne.s32.totalorder %s46, %s47
      %p61 = scmp.eq.s32.totalorder %s20, 2
      %p62 = por %p60, %p61
      %p64 = scmp.ne.s32.totalorder %s47, %s63
      %p65 = scmp.eq.s32.totalorder %s20, 0
      %p66 = por %p64, %p65
      %s68 = sadd.s32 %s67, 1
      %p71 = scmp.eq.s32.totalorder %s14, 2
      %p72 = scmp.ne.s32.totalorder %s67, %s69
      %p73 = scmp.eq.s32.totalorder %s14, 0
      %p74 = por %p72, %p73
      %p75 = scmp.ne.s32.totalorder %s67, %s69
      %p76 = scmp.eq.s32.totalorder %s19, 2
      %p77 = por %p75, %p76
      %p78 = scmp.ne.s32.totalorder %s69, %s70
      %p79 = scmp.eq.s32.totalorder %s19, 0
      %p80 = por %p78, %p79
      %p81 = scmp.ne.s32.totalorder %s69, %s70
      %p82 = scmp.eq.s32.totalorder %s20, 2
      %p83 = por %p81, %p82
      %p85 = scmp.ne.s32.totalorder %s70, %s84
      %p86 = scmp.eq.s32.totalorder %s20, 0
      %p87 = por %p85, %p86
      %s89 = sadd.s32 %s88, 1
      %p92 = scmp.eq.s32.totalorder %s14, 2
      %p93 = scmp.ne.s32.totalorder %s88, %s90
      %p94 = scmp.eq.s32.totalorder %s14, 0
      %p95 = por %p93, %p94
      %p96 = scmp.ne.s32.totalorder %s88, %s90
      %p97 = scmp.eq.s32.totalorder %s19, 2
      %p98 = por %p96, %p97
      %p99 = scmp.ne.s32.totalorder %s90, %s91
      %p100 = scmp.eq.s32.totalorder %s19, 0
      %p101 = por %p99, %p100
      %p102 = scmp.ne.s32.totalorder %s90, %s91
      %p103 = scmp.eq.s32.totalorder %s20, 2
      %p104 = por %p102, %p103
      %p106 = scmp.ne.s32.totalorder %s91, %s105
      %p107 = scmp.eq.s32.totalorder %s20, 0
      %p108 = por %p106, %p107
      %s109 = ssub.s32 %s21, %s40
      %p110 = scmp.eq.s32.totalorder %s109, 0
      %s112 = sadd.s32 %s111, 1
      %s113 = scalar_select %p110, %s111, %s112
      %p116 = pneg %p110
      %p117 = scmp.eq.s32.totalorder %s14, 2
      %p118 = por %p116, %p117
      %p119 = scmp.ne.s32.totalorder %s111, %s114
      %p120 = scmp.eq.s32.totalorder %s14, 0
      %p121 = por %p119, %p120
      %p122 = scmp.ne.s32.totalorder %s111, %s114
      %p123 = scmp.eq.s32.totalorder %s19, 2
      %p124 = por %p122, %p123
      %p125 = scmp.ne.s32.totalorder %s114, %s115
      %p126 = scmp.eq.s32.totalorder %s19, 0
      %p127 = por %p125, %p126
      %p128 = scmp.ne.s32.totalorder %s114, %s115
      %p129 = scmp.eq.s32.totalorder %s20, 2
      %p130 = por %p128, %p129
      %p132 = scmp.ne.s32.totalorder %s115, %s131
      %p133 = scmp.eq.s32.totalorder %s20, 0
      %p134 = por %p132, %p133
      %s135 = ssub.s32 %s22, %s36
      %s136 = ssub.s32 %s21, %s40
      %s137 = sor.u32 %s135, %s136
      %s138 = ssub.s32 %s23, %s32
      %s139 = sor.u32 %s137, %s138
      %p140 = scmp.eq.s32.totalorder %s139, 0
      %s142 = sadd.s32 %s141, 1
      %s143 = scalar_select %p140, %s141, %s142
      %p146 = pneg %p140
      %p147 = scmp.eq.s32.totalorder %s14, 2
      %p148 = por %p146, %p147
      %p149 = scmp.ne.s32.totalorder %s141, %s144
      %p150 = scmp.eq.s32.totalorder %s14, 0
      %p151 = por %p149, %p150
      %p152 = scmp.ne.s32.totalorder %s141, %s144
      %p153 = scmp.eq.s32.totalorder %s19, 2
      %p154 = por %p152, %p153
      %p155 = scmp.ne.s32.totalorder %s144, %s145
      %p156 = scmp.eq.s32.totalorder %s19, 0
      %p157 = por %p155, %p156
      %p158 = scmp.ne.s32.totalorder %s144, %s145
      %p159 = scmp.eq.s32.totalorder %s20, 2
      %p160 = por %p158, %p159
      %p162 = scmp.ne.s32.totalorder %s145, %s161
      %p163 = scmp.eq.s32.totalorder %s20, 0
      %p164 = por %p162, %p163
      %p165 = scmp.le.s32.totalorder 1, %s14
      %p166 = scmp.lt.s32.totalorder %s14, 4
      %p167 = pnand %p165, %p166
      %p168 = pneg %p167
      // Predicated region
      $region9: #{tpu_custom_call.1} parent=5 // pred_check
        _
      $region10: #{tpu_custom_call.1} parent=5 // pred_check_branch
        %170 = sbr.rel (%p167) target = $region12
      $region11: #{tpu_custom_call.1} parent=5 // pred_region
        %s171 = ssub.s32 %s14, 1
        // Predicated region
        $region13: #{tpu_custom_call.1} parent=11 // pred_check
          %p172 = pneg %p59
        $region14: #{tpu_custom_call.1} parent=11 // pred_check_branch
          %174 = sbr.rel (%p172) target = $region16
        $region15: #{tpu_custom_call.1} parent=11 // pred_region
          %s175 = smul.u32 2, %s24
          %p176 = scmp.lt.s32.totalorder %s175, 1
          %s177 = scalar_select %p176, %s175, 1
          %s178 = smul.addr %s177, 4
          %s179 = scalar_lea.vmem %s0, %s178
          %s180 = smul.u32 2, %s24
        $region16: #{tpu_custom_call.1} parent=11 // pred_fallthru
          _
        // Predicated region
        $region17: #{tpu_custom_call.1} parent=11 // pred_check
          %p181 = pneg %p80
        $region18: #{tpu_custom_call.1} parent=11 // pred_check_branch
          %183 = sbr.rel (%p181) target = $region20
        $region19: #{tpu_custom_call.1} parent=11 // pred_region
          %s185 = ssub.s32 3072, 3072
          %186 = vsyncadd [#allocation4], %s185
          %s187 = sshll.u32 [#allocation3], 4
          %s188 = int_to_ptr.vmem [resolvable:$true] %s187
          %193 = dma.hbm_to_vmem [thread:$0]  %s1, 3072, %s188, [#allocation4], 64, 64, 4
        $region20: #{tpu_custom_call.1} parent=11 // pred_fallthru
          _
        // Predicated region
        $region21: #{tpu_custom_call.1} parent=11 // pred_check
          %p194 = pneg %p101
        $region22: #{tpu_custom_call.1} parent=11 // pred_check_branch
          %196 = sbr.rel (%p194) target = $region24
        $region23: #{tpu_custom_call.1} parent=11 // pred_region
          _
        $region24: #{tpu_custom_call.1} parent=11 // pred_fallthru
          _
        // Predicated region
        $region25: #{tpu_custom_call.1} parent=11 // pred_check
          %p197 = pneg %p127
        $region26: #{tpu_custom_call.1} parent=11 // pred_check_branch
          %199 = sbr.rel (%p197) target = $region28
        $region27: #{tpu_custom_call.1} parent=11 // pred_region
          %s200 = smul.u32 2, %s24
          %p201 = scmp.lt.s32.totalorder %s200, 1
          %s202 = scalar_select %p201, %s200, 1
          %s203 = smul.addr %s202, 8
          %s204 = scalar_lea.vmem %s3, %s203
          %s205 = smul.u32 2, %s24
        $region28: #{tpu_custom_call.1} parent=11 // pred_fallthru
          _
      $region12: #{tpu_custom_call.1} parent=5 // pred_fallthru
        _
      %p206 = scmp.lt.s32.totalorder %s14, 3
      // Predicated region
      $region29: #{tpu_custom_call.1} parent=5 // pred_check
        %p207 = pneg %p206
      $region30: #{tpu_custom_call.1} parent=5 // pred_check_branch
        %209 = sbr.rel (%p207) target = $region32
      $region31: #{tpu_custom_call.1} parent=5 // pred_region
        _
      $region32: #{tpu_custom_call.1} parent=5 // pred_fallthru
        _
      %p210 = scmp.le.s32.totalorder 1, %s14
      %p211 = scmp.lt.s32.totalorder %s14, 4
      %p212 = pnand %p210, %p211
      %p213 = pneg %p212
      // Predicated region
      $region33: #{tpu_custom_call.1} parent=5 // pred_check
        _
      $region34: #{tpu_custom_call.1} parent=5 // pred_check_branch
        %215 = sbr.rel (%p212) target = $region36
      $region35: #{tpu_custom_call.1} parent=5 // pred_region
        %s216 = ssub.s32 %s14, 1
        // Predicated region
        $region37: #{tpu_custom_call.1} parent=35 // pred_check
          %p217 = pneg %p80
        $region38: #{tpu_custom_call.1} parent=35 // pred_check_branch
          %219 = sbr.rel (%p217) target = $region40
        $region39: #{tpu_custom_call.1} parent=35 // pred_region
          %220 = dma.done [#allocation4], 3072
        $region40: #{tpu_custom_call.1} parent=35 // pred_fallthru
          _
        %s221 = smul.u32 2, %s24
        %p222 = scmp.lt.s32.totalorder %s221, 1
        %s223 = scalar_select %p222, %s221, 1
        %s224 = smul.addr %s223, 4
        %s225 = scalar_lea.vmem %s0, %s224
        %p226 = pneg %p59
        %p227 = pneg %p56
        %p228 = pneg %p80
        %p229 = pneg %p77
        %p230 = pneg %p101
        %p231 = pneg %p98
        %s232 = smul.u32 2, %s24
        %p233 = scmp.lt.s32.totalorder %s232, 1
        %s234 = scalar_select %p233, %s232, 1
        %s235 = smul.addr %s234, 8
        %s236 = scalar_lea.vmem %s3, %s235
        %p237 = pneg %p127
        %p238 = pneg %p124
        %p239 = pneg %p157
        %p240 = pneg %p154
        %s241 = sand.u32 %s144, 1
        %s242 = scalar_lea.sflag [#allocation5], %s241
        %s243 = sand.u32 %s144, 1
        %s244 = smul.addr %s243, 8
        %s245 = scalar_lea.vmem [#allocation6], %s244
        %s246 = smul.u32 2, %s24
        %p247 = scmp.lt.s32.totalorder %s246, 1
        %s248 = scalar_select %p247, %s246, 1
        %s249 = smul.addr %s248, 4
        %s250 = scalar_lea.vmem %s0, %s249
        %s251 = smul.u32 2, %s24
        %s252 = smul.u32 2, %s24
        %p253 = scmp.lt.s32.totalorder %s252, 1
        %s254 = scalar_select %p253, %s252, 1
        %s255 = smul.addr %s254, 8
        %s256 = scalar_lea.vmem %s3, %s255
        %s257 = smul.u32 2, %s24
        %s258 = smul.u32 2, %s24
        %p260 = scmp.lt.s32.totalorder %s25, 0
        %s261 = ssub.s32 0, %s25
        %s262 = scalar_select %p260, %s261, %s25
        %s263 = sand.u32 %s262, 1
        %s264 = ssub.s32 0, %s263
        %s265 = scalar_select %p260, %s264, %s263
        %s266 = ssub.s32 1, %s265
        %p267 = scmp.eq.s32.totalorder %s25, 0
        %p268 = scmp.eq.s32.totalorder %s26, 0
        %p269 = pnand %p267, %p268
        %p270 = pneg %p269
        // Predicated region
        $region41: #{tpu_custom_call.1} parent=35 // pred_check
          _
        $region42: #{tpu_custom_call.1} parent=35 // pred_check_branch
          %272 = sbr.rel (%p269) target = $region44
        $region43: #{tpu_custom_call.1} parent=35 // pred_region
          %v273 = vld [vmem:[%s250] sm:$0xf]
          %v274 = vld [vmem:[%s250 + $0x4] sm:$0xf]
          %v277 = vunpack.c.l.b16 %v273
          %v278 = vunpack.c.l.b16 %v274
          %v279 = vpack.c.b16 %v278, %v277
          %281 = vst [vmem:[#allocation2] sm:$0xff] %v279
        $region44: #{tpu_custom_call.1} parent=35 // pred_fallthru
          _
        %s282 = smul.addr %s265, 8
        %s283 = scalar_lea.vmem [#allocation2], %s282
        %v284 = vld [vmem:[%s283] sm:$0xff]
        %s285 = smul.u32 %s25, 16
        %s286 = smul.addr %s285, 4
        %s287 = scalar_lea.vmem [#allocation3], %s286
        %v288 = vld [vmem:[%s287] sm:$0xf]
        %v289 = vld [vmem:[%s287 + $0x4] sm:$0xf]
        %v290 = vld [vmem:[%s287 + $0x8] sm:$0xf]
        %v291 = vld [vmem:[%s287 + $0xc] sm:$0xf]
        %v292 = vld [vmem:[%s287 + $0x10] sm:$0xf]
        %v293 = vld [vmem:[%s287 + $0x14] sm:$0xf]
        %v294 = vld [vmem:[%s287 + $0x18] sm:$0xf]
        %v295 = vld [vmem:[%s287 + $0x1c] sm:$0xf]
        %v296 = vld [vmem:[%s287 + $0x20] sm:$0xf]
        %v297 = vld [vmem:[%s287 + $0x24] sm:$0xf]
        %v298 = vld [vmem:[%s287 + $0x28] sm:$0xf]
        %v299 = vld [vmem:[%s287 + $0x2c] sm:$0xf]
        %v300 = vld [vmem:[%s287 + $0x30] sm:$0xf]
        %v301 = vld [vmem:[%s287 + $0x34] sm:$0xf]
        %v302 = vld [vmem:[%s287 + $0x38] sm:$0xf]
        %v303 = vld [vmem:[%s287 + $0x3c] sm:$0xf]
        %s304 = scalar_lea.vmem %s2, %s25
        %v305 = vld [vmem:[%s304] sm:$0x1]
        %v307 = vlaneseq
        %v308 = vshrl.u32 %v307, 7
        %v309 = vsub.s32 0, %v308
        %v310 = vrot.slane %v305, %v309
        %v328 = vunpack.c.l.b16 %v288
        %v329 = vunpack.c.l.b16 %v289
        %v330 = vunpack.c.l.b16 %v290
        %v331 = vunpack.c.l.b16 %v291
        %v332 = vunpack.c.l.b16 %v292
        %v333 = vunpack.c.l.b16 %v293
        %v334 = vunpack.c.l.b16 %v294
        %v335 = vunpack.c.l.b16 %v295
        %v336 = vunpack.c.l.b16 %v296
        %v337 = vunpack.c.l.b16 %v297
        %v338 = vunpack.c.l.b16 %v298
        %v339 = vunpack.c.l.b16 %v299
        %v340 = vunpack.c.l.b16 %v300
        %v341 = vunpack.c.l.b16 %v301
        %v342 = vunpack.c.l.b16 %v302
        %v343 = vunpack.c.l.b16 %v303
        %v344 = vpack.c.b16 %v329, %v328
        %v345 = vpack.c.b16 %v331, %v330
        %v346 = vpack.c.b16 %v333, %v332
        %v347 = vpack.c.b16 %v335, %v334
        %v348 = vpack.c.b16 %v337, %v336
        %v349 = vpack.c.b16 %v339, %v338
        %v350 = vpack.c.b16 %v341, %v340
        %v351 = vpack.c.b16 %v343, %v342
        %360 = vmatprep.subr.bf16.mxu0 0
        %361 = vmatpush1.bf16.msra.mxu0 %v344
        %362 = vmatprep.subr.bf16.mxu0 0
        %363 = vmatpush1.bf16.msra.mxu0 %v345
        %364 = vmatprep.subr.bf16.mxu0 0
        %365 = vmatpush1.bf16.msra.mxu0 %v346
        %366 = vmatprep.subr.bf16.mxu0 0
        %367 = vmatpush1.bf16.msra.mxu0 %v347
        %368 = vmatprep.subr.bf16.mxu0 0
        %369 = vmatpush1.bf16.msra.mxu0 %v348
        %370 = vmatprep.subr.bf16.mxu0 0
        %371 = vmatpush1.bf16.msra.mxu0 %v349
        %372 = vmatprep.subr.bf16.mxu0 0
        %373 = vmatpush1.bf16.msra.mxu0 %v350
        %374 = vmatprep.subr.bf16.mxu0 0
        %375 = vmatpush1.bf16.msra.mxu0 %v351
        %376 = vmatprep.subr.bf16.mxu0 0
        %377 = vmatpush1.bf16.msra.mxu0 0
        %378 = vmatprep.subr.bf16.mxu0 0
        %379 = vmatpush1.bf16.msra.mxu0 0
        %380 = vmatprep.subr.bf16.mxu0 0
        %381 = vmatpush1.bf16.msra.mxu0 0
        %382 = vmatprep.subr.bf16.mxu0 0
        %383 = vmatpush1.bf16.msra.mxu0 0
        %384 = vmatprep.subr.bf16.mxu0 0
        %385 = vmatpush1.bf16.msra.mxu0 0
        %386 = vmatprep.subr.bf16.mxu0 0
        %387 = vmatpush1.bf16.msra.mxu0 0
        %388 = vmatprep.subr.bf16.mxu0 0
        %389 = vmatpush1.bf16.msra.mxu0 0
        %390 = vmatprep.subr.bf16.mxu0 0
        %391 = vmatpush1.bf16.msra.mxu0 0
        %392 = vmatprep.mubr.bf16.mxu0 0
        %393 = vmatmul.mubr.bf16.gmra.mrb[0].mxu0 %v284
        %v394 = vpop.f32.mrb[0].mxu0
        %v395 = vadd.f32 %v310, %v394
        %v396 = vpop.f32.mrb[0].mxu0
        %v397 = vpop.f32.mrb[0].mxu0
        %v398 = vadd.f32 %v310, %v397
        %v399 = vpop.f32.mrb[0].mxu0
        %400 = vdwg.mxu0
        %v401 = vmax.f32 %v395, 0.0
        %v402 = vmax.f32 %v398, 0.0
        %v403 = vld [vmem:[%s256] sm:$0xff]
        %v404 = vld [vmem:[%s256 + $0x8] sm:$0xff]
        %406 = vset.pattern.permute.xlu0 0
        %407 = vperm.xlu0 %406, %v403
        %v408 = vpop.permute.xlu0 %407
        %411 = vset.pattern.permute.xlu0 0
        %412 = vperm.xlu0 %411, %v404
        %v413 = vpop.permute.xlu0 %412
        %v415 = vmul.f32 %v401, %v408
        %v416 = vmul.f32 %v402, %v413
        %v417 = vpack.c.bf16 %v416, %v415
        %v419 = vunpack.c.l.b16 %v417
        %v420 = vunpack.c.h.b16 %v417
        %v421 = vpack.c.b16 %v419, %v419
        %v422 = vpack.c.b16 %v420, %v420
        %425 = vst [vmem:[%s245] sm:$0xf] %v421
        %426 = vst [vmem:[%s245 + $0x4] sm:$0xf] %v422
        %p427 = scmp.lt.s32.totalorder %s25, 2
        // Predicated region
        $region45: #{tpu_custom_call.1} parent=35 // pred_check
          %p428 = pneg %p427
        $region46: #{tpu_custom_call.1} parent=35 // pred_check_branch
          %430 = sbr.rel (%p428) target = $region48
        $region47: #{tpu_custom_call.1} parent=35 // pred_region
          %s431 = smul.addr %s266, 8
          %s432 = scalar_lea.vmem [#allocation2], %s431
          %433 = vst [vmem:[%s432] sm:$0xff] %v417
        $region48: #{tpu_custom_call.1} parent=35 // pred_fallthru
          _
        %s434 = sand.u32 %s144, 1
        %s435 = scalar_lea.sflag [#allocation5], %s434
        %s436 = sand.u32 %s144, 1
        %s437 = smul.addr %s436, 8
        %s438 = scalar_lea.vmem [#allocation6], %s437
        // Predicated region
        $region49: #{tpu_custom_call.1} parent=35 // pred_check
          %p439 = pneg %p154
        $region50: #{tpu_custom_call.1} parent=35 // pred_check_branch
          %441 = sbr.rel (%p439) target = $region52
        $region51: #{tpu_custom_call.1} parent=35 // pred_region
          %s442 = smul.u32 2, %s24
          %s444 = ssub.s32 128, 128
          %445 = vsyncadd %s435, %s444
          %s446 = sadd.s32 %s26, %s442
          %s447 = smul.addr %s25, 2
          %s448 = sadd.s32 %s446, %s447
          %s449 = smul.addr %s448, 64
          %s450 = scalar_lea.hbm %s4, %s449
          %s451 = sshll.u32 %s438, 4
          %s452 = int_to_ptr.vmem [resolvable:$true] %s451
          %457 = dma.vmem_to_hbm [thread:$0]  %s452, 128, %s450, %s435, 64, 64, 4
        $region52: #{tpu_custom_call.1} parent=35 // pred_fallthru
          _
      $region36: #{tpu_custom_call.1} parent=5 // pred_fallthru
        _
      %p458 = scmp.le.s32.totalorder 2, %s14
      // Predicated region
      $region53: #{tpu_custom_call.1} parent=5 // pred_check
        %p459 = pneg %p458
      $region54: #{tpu_custom_call.1} parent=5 // pred_check_branch
        %461 = sbr.rel (%p459) target = $region56
      $region55: #{tpu_custom_call.1} parent=5 // pred_region
        %s462 = ssub.s32 %s14, 2
        // Predicated region
        $region57: #{tpu_custom_call.1} parent=55 // pred_check
          %p463 = pneg %p160
        $region58: #{tpu_custom_call.1} parent=55 // pred_check_branch
          %465 = sbr.rel (%p463) target = $region60
        $region59: #{tpu_custom_call.1} parent=55 // pred_region
          %s466 = sand.u32 %s145, 1
          %s467 = scalar_lea.sflag [#allocation5], %s466
          %s468 = sand.u32 %s145, 1
          %s469 = smul.addr %s468, 8
          %s470 = scalar_lea.vmem [#allocation6], %s469
          %471 = dma.done %s467, 128
        $region60: #{tpu_custom_call.1} parent=55 // pred_fallthru
          _
      $region56: #{tpu_custom_call.1} parent=5 // pred_fallthru
        _
    $region6: #{tpu_custom_call.1} parent=1 // loop_footer
      %s18 = sadd.s32 1, %s14
    $region7: #{tpu_custom_call.1} parent=1 // loop_footer_branch
      %13 = sbr.rel target = $region3
    $region8: #{tpu_custom_call.1} parent=1 // loop_exit
      _
    %472 = vsyncpa [#allocation4], 1
    %s473 = scalar_lea.sflag [#allocation4], 1
    %474 = vsyncpa %s473, 1
    %475 = vsyncpa [#allocation5], 1
    %s476 = scalar_lea.sflag [#allocation5], 1
    %477 = vsyncpa %s476, 1

// kernel: tpu_custom_call.1
$region0: #{tpu_custom_call.1}
  #allocation0 [shape = 'u32[]', space=smem, size = 0x4, offset = 0x4, fixed_abs, tag = 'smem constant byte address 0x4 - core index']
  #allocation1 [shape = 'u32[144,128]{1,0:T(1,128)}', space=vmem, size = 0x12000, scoped, tag = 'internal scratch']
  #allocation2 [shape = 'bf16[2,16,128]{2,1,0:T(16,128)(2,1)}', space=vmem, size = 0x2000, scoped, tag = 'scratch operand']
  %s0 = inlined_call_operand.vmem [shape: bf16[16,128], index: 0, kind: input, shape index: {}]
  %s1 = inlined_call_operand.hbm [shape: bf16[3,128,128], index: 1, kind: input, shape index: {}]
  %s2 = inlined_call_operand.vmem [shape: f32[3,1,128], index: 2, kind: input, shape index: {}]
  %s3 = inlined_call_operand.vmem [shape: f32[16,1], index: 3, kind: input, shape index: {}]
  %s4 = inlined_call_operand.hbm [shape: bf16[3,16,128], index: 4, kind: output, shape index: {}]
  %s5 = sld [smem:[#allocation0]]
  $region61: #{tpu_custom_call.1} parent=0
    _
  %s7 = ssub.s32 1, %s5
  %s8 = scalar_select 0, %s7, %s5
  $region1: #{tpu_custom_call.1} parent=0
    #allocation3 [shape = 'u8[98304]{0}', space=vmem, size = 0x18000, scoped, tag = 'input window, operand 1, single buffered']
    #allocation4 [shape = 's32[2]{0}', space=sflag, size = 0x8, scoped, tag = 'scoped memory for tpu_custom_call.1']
    #allocation5 [shape = 's32[2]{0}', space=sflag, size = 0x8, scoped, tag = 'scoped memory for tpu_custom_call.1']
    #allocation6 [shape = 'u8[8192]{0}', space=vmem, size = 0x2000, scoped, tag = 'output window, operand 0']
    %9 = vsyncpa [#allocation4], 0
    %10 = vsyncpa [#allocation5], 0
    %s11 = scalar_lea.sflag [#allocation5], 1
    %12 = vsyncpa %s11, 0
    loop: start=0, step=1, limit=5
    $region2: #{tpu_custom_call.1} parent=1 // loop_pre_header
      _
    $region3: #{tpu_custom_call.1} parent=1 // loop_header
      %s14 = sphi 0, %s18
      %p15 = scmp.ge.s32.totalorder %s14, 5
      %s21 = sphi 0, %s40
      %s22 = sphi 0, %s36
      %s23 = sphi 0, %s32
      %s24 = sphi 0, %s21
      %s25 = sphi 0, %s22
      %s26 = sphi 0, %s23
      %s27 = sphi 0, %s24
      %s28 = sphi 0, %s25
      %s29 = sphi 0, %s26
      %s43 = sphi 0, %s45
      %s46 = sphi 0, %s43
      %s47 = sphi 0, %s46
      %s63 = sphi 0, %s47
      %s67 = sphi 0, %s67
      %s69 = sphi 0, %s67
      %s70 = sphi 0, %s69
      %s84 = sphi 0, %s70
      %s88 = sphi 0, %s88
      %s90 = sphi 0, %s88
      %s91 = sphi 0, %s90
      %s105 = sphi 0, %s91
      %s111 = sphi 0, %s113
      %s114 = sphi 0, %s111
      %s115 = sphi 0, %s114
      %s131 = sphi 0, %s115
      %s141 = sphi 0, %s143
      %s144 = sphi 0, %s141
      %s145 = sphi 0, %s144
      %s161 = sphi 0, %s145
    $region4: #{tpu_custom_call.1} parent=1 // loop_header_branch
      %17 = sbr.rel (%p15) target = $region8
    $region5: #{tpu_custom_call.1} parent=1 // loop_body
      %s19 = ssub.s32 %s14, 1
      %s20 = ssub.s32 %s14, 2
      %s30 = sadd.s32 1, %s23
      %p31 = scmp.ge.s32.totalorder %s30, 1
      %s32 = scalar_select %p31, 0, %s30
      %s33 = sadd.s32 1, %s22
      %s34 = scalar_select %p31, %s33, %s22
      %p35 = scmp.ge.s32.totalorder %s34, 3
      %s36 = scalar_select %p35, 0, %s34
      %s37 = sadd.s32 1, %s21
      %s38 = scalar_select %p35, %s37, %s21
      %p39 = scmp.ge.s32.totalorder %s38, 1
      %s40 = scalar_select %p39, 0, %s38
      %s41 = ssub.s32 %s21, %s40
      %p42 = scmp.eq.s32.totalorder %s41, 0
      %s44 = sadd.s32 %s43, 1
      %s45 = scalar_select %p42, %s43, %s44
      %p48 = pneg %p42
      %p49 = scmp.eq.s32.totalorder %s14, 2
      %p50 = por %p48, %p49
      %p51 = scmp.ne.s32.totalorder %s43, %s46
      %p52 = scmp.eq.s32.totalorder %s14, 0
      %p53 = por %p51, %p52
      %p54 = scmp.ne.s32.totalorder %s43, %s46
      %p55 = scmp.eq.s32.totalorder %s19, 2
      %p56 = por %p54, %p55
      %p57 = scmp.ne.s32.totalorder %s46, %s47
      %p58 = scmp.eq.s32.totalorder %s19, 0
      %p59 = por %p57, %p58
      %p60 = scmp.ne.s32.totalorder %s46, %s47
      %p61 = scmp.eq.s32.totalorder %s20, 2
      %p62 = por %p60, %p61
      %p64 = scmp.ne.s32.totalorder %s47, %s63
      %p65 = scmp.eq.s32.totalorder %s20, 0
      %p66 = por %p64, %p65
      %s68 = sadd.s32 %s67, 1
      %p71 = scmp.eq.s32.totalorder %s14, 2
      %p72 = scmp.ne.s32.totalorder %s67, %s69
      %p73 = scmp.eq.s32.totalorder %s14, 0
      %p74 = por %p72, %p73
      %p75 = scmp.ne.s32.totalorder %s67, %s69
      %p76 = scmp.eq.s32.totalorder %s19, 2
      %p77 = por %p75, %p76
      %p78 = scmp.ne.s32.totalorder %s69, %s70
      %p79 = scmp.eq.s32.totalorder %s19, 0
      %p80 = por %p78, %p79
      %p81 = scmp.ne.s32.totalorder %s69, %s70
      %p82 = scmp.eq.s32.totalorder %s20, 2
      %p83 = por %p81, %p82
      %p85 = scmp.ne.s32.totalorder %s70, %s84
      %p86 = scmp.eq.s32.totalorder %s20, 0
      %p87 = por %p85, %p86
      %s89 = sadd.s32 %s88, 1
      %p92 = scmp.eq.s32.totalorder %s14, 2
      %p93 = scmp.ne.s32.totalorder %s88, %s90
      %p94 = scmp.eq.s32.totalorder %s14, 0
      %p95 = por %p93, %p94
      %p96 = scmp.ne.s32.totalorder %s88, %s90
      %p97 = scmp.eq.s32.totalorder %s19, 2
      %p98 = por %p96, %p97
      %p99 = scmp.ne.s32.totalorder %s90, %s91
      %p100 = scmp.eq.s32.totalorder %s19, 0
      %p101 = por %p99, %p100
      %p102 = scmp.ne.s32.totalorder %s90, %s91
      %p103 = scmp.eq.s32.totalorder %s20, 2
      %p104 = por %p102, %p103
      %p106 = scmp.ne.s32.totalorder %s91, %s105
      %p107 = scmp.eq.s32.totalorder %s20, 0
      %p108 = por %p106, %p107
      %s109 = ssub.s32 %s21, %s40
      %p110 = scmp.eq.s32.totalorder %s109, 0
      %s112 = sadd.s32 %s111, 1
      %s113 = scalar_select %p110, %s111, %s112
      %p116 = pneg %p110
      %p117 = scmp.eq.s32.totalorder %s14, 2
      %p118 = por %p116, %p117
      %p119 = scmp.ne.s32.totalorder %s111, %s114
      %p120 = scmp.eq.s32.totalorder %s14, 0
      %p121 = por %p119, %p120
      %p122 = scmp.ne.s32.totalorder %s111, %s114
      %p123 = scmp.eq.s32.totalorder %s19, 2
      %p124 = por %p122, %p123
      %p125 = scmp.ne.s32.totalorder %s114, %s115
      %p126 = scmp.eq.s32.totalorder %s19, 0
      %p127 = por %p125, %p126
      %p128 = scmp.ne.s32.totalorder %s114, %s115
      %p129 = scmp.eq.s32.totalorder %s20, 2
      %p130 = por %p128, %p129
      %p132 = scmp.ne.s32.totalorder %s115, %s131
      %p133 = scmp.eq.s32.totalorder %s20, 0
      %p134 = por %p132, %p133
      %s135 = ssub.s32 %s22, %s36
      %s136 = ssub.s32 %s21, %s40
      %s137 = sor.u32 %s135, %s136
      %s138 = ssub.s32 %s23, %s32
      %s139 = sor.u32 %s137, %s138
      %p140 = scmp.eq.s32.totalorder %s139, 0
      %s142 = sadd.s32 %s141, 1
      %s143 = scalar_select %p140, %s141, %s142
      %p146 = pneg %p140
      %p147 = scmp.eq.s32.totalorder %s14, 2
      %p148 = por %p146, %p147
      %p149 = scmp.ne.s32.totalorder %s141, %s144
      %p150 = scmp.eq.s32.totalorder %s14, 0
      %p151 = por %p149, %p150
      %p152 = scmp.ne.s32.totalorder %s141, %s144
      %p153 = scmp.eq.s32.totalorder %s19, 2
      %p154 = por %p152, %p153
      %p155 = scmp.ne.s32.totalorder %s144, %s145
      %p156 = scmp.eq.s32.totalorder %s19, 0
      %p157 = por %p155, %p156
      %p158 = scmp.ne.s32.totalorder %s144, %s145
      %p159 = scmp.eq.s32.totalorder %s20, 2
      %p160 = por %p158, %p159
      %p162 = scmp.ne.s32.totalorder %s145, %s161
      %p163 = scmp.eq.s32.totalorder %s20, 0
      %p164 = por %p162, %p163
      %p165 = scmp.le.s32.totalorder 1, %s14
      %p166 = scmp.lt.s32.totalorder %s14, 4
      %p167 = pnand %p165, %p166
      %p168 = pneg %p167
      // Predicated region
      $region9: #{tpu_custom_call.1} parent=5 // pred_check
        _
      $region10: #{tpu_custom_call.1} parent=5 // pred_check_branch
        %170 = sbr.rel (%p167) target = $region12
      $region11: #{tpu_custom_call.1} parent=5 // pred_region
        %s171 = ssub.s32 %s14, 1
        // Predicated region
        $region13: #{tpu_custom_call.1} parent=11 // pred_check
          %p172 = pneg %p59
        $region14: #{tpu_custom_call.1} parent=11 // pred_check_branch
          %174 = sbr.rel (%p172) target = $region16
        $region15: #{tpu_custom_call.1} parent=11 // pred_region
          %s175 = smul.u32 2, %s24
          %p176 = scmp.lt.s32.totalorder %s175, 1
          %s177 = scalar_select %p176, %s175, 1
          %s178 = smul.addr %s177, 4
          %s179 = scalar_lea.vmem %s0, %s178
          %s180 = smul.u32 2, %s24
        $region16: #{tpu_custom_call.1} parent=11 // pred_fallthru
          _
        // Predicated region
        $region17: #{tpu_custom_call.1} parent=11 // pred_check
          %p181 = pneg %p80
        $region18: #{tpu_custom_call.1} parent=11 // pred_check_branch
          %183 = sbr.rel (%p181) target = $region20
        $region19: #{tpu_custom_call.1} parent=11 // pred_region
          %s185 = ssub.s32 3072, 3072
          %186 = vsyncadd [#allocation4], %s185
          %s187 = sshll.u32 [#allocation3], 4
          %s188 = int_to_ptr.vmem [resolvable:$true] %s187
          %193 = dma.hbm_to_vmem [thread:$0]  %s1, 3072, %s188, [#allocation4], 64, 64, 4
        $region20: #{tpu_custom_call.1} parent=11 // pred_fallthru
          _
        // Predicated region
        $region21: #{tpu_custom_call.1} parent=11 // pred_check
          %p194 = pneg %p101
        $region22: #{tpu_custom_call.1} parent=11 // pred_check_branch
          %196 = sbr.rel (%p194) target = $region24
        $region23: #{tpu_custom_call.1} parent=11 // pred_region
          _
        $region24: #{tpu_custom_call.1} parent=11 // pred_fallthru
          _
        // Predicated region
        $region25: #{tpu_custom_call.1} parent=11 // pred_check
          %p197 = pneg %p127
        $region26: #{tpu_custom_call.1} parent=11 // pred_check_branch
          %199 = sbr.rel (%p197) target = $region28
        $region27: #{tpu_custom_call.1} parent=11 // pred_region
          %s200 = smul.u32 2, %s24
          %p201 = scmp.lt.s32.totalorder %s200, 1
          %s202 = scalar_select %p201, %s200, 1
          %s203 = smul.addr %s202, 8
          %s204 = scalar_lea.vmem %s3, %s203
          %s205 = smul.u32 2, %s24
        $region28: #{tpu_custom_call.1} parent=11 // pred_fallthru
          _
      $region12: #{tpu_custom_call.1} parent=5 // pred_fallthru
        _
      %p206 = scmp.lt.s32.totalorder %s14, 3
      // Predicated region
      $region29: #{tpu_custom_call.1} parent=5 // pred_check
        %p207 = pneg %p206
      $region30: #{tpu_custom_call.1} parent=5 // pred_check_branch
        %209 = sbr.rel (%p207) target = $region32
      $region31: #{tpu_custom_call.1} parent=5 // pred_region
        _
      $region32: #{tpu_custom_call.1} parent=5 // pred_fallthru
        _
      %p210 = scmp.le.s32.totalorder 1, %s14
      %p211 = scmp.lt.s32.totalorder %s14, 4
      %p212 = pnand %p210, %p211
      %p213 = pneg %p212
      // Predicated region
      $region33: #{tpu_custom_call.1} parent=5 // pred_check
        _
      $region34: #{tpu_custom_call.1} parent=5 // pred_check_branch
        %215 = sbr.rel (%p212) target = $region36
      $region35: #{tpu_custom_call.1} parent=5 // pred_region
        %s216 = ssub.s32 %s14, 1
        // Predicated region
        $region37: #{tpu_custom_call.1} parent=35 // pred_check
          %p217 = pneg %p80
        $region38: #{tpu_custom_call.1} parent=35 // pred_check_branch
          %219 = sbr.rel (%p217) target = $region40
        $region39: #{tpu_custom_call.1} parent=35 // pred_region
          %220 = dma.done [#allocation4], 3072
        $region40: #{tpu_custom_call.1} parent=35 // pred_fallthru
          _
        %s221 = smul.u32 2, %s24
        %p222 = scmp.lt.s32.totalorder %s221, 1
        %s223 = scalar_select %p222, %s221, 1
        %s224 = smul.addr %s223, 4
        %s225 = scalar_lea.vmem %s0, %s224
        %p226 = pneg %p59
        %p227 = pneg %p56
        %p228 = pneg %p80
        %p229 = pneg %p77
        %p230 = pneg %p101
        %p231 = pneg %p98
        %s232 = smul.u32 2, %s24
        %p233 = scmp.lt.s32.totalorder %s232, 1
        %s234 = scalar_select %p233, %s232, 1
        %s235 = smul.addr %s234, 8
        %s236 = scalar_lea.vmem %s3, %s235
        %p237 = pneg %p127
        %p238 = pneg %p124
        %p239 = pneg %p157
        %p240 = pneg %p154
        %s241 = sand.u32 %s144, 1
        %s242 = scalar_lea.sflag [#allocation5], %s241
        %s243 = sand.u32 %s144, 1
        %s244 = smul.addr %s243, 8
        %s245 = scalar_lea.vmem [#allocation6], %s244
        %s246 = smul.u32 2, %s24
        %p247 = scmp.lt.s32.totalorder %s246, 1
        %s248 = scalar_select %p247, %s246, 1
        %s249 = smul.addr %s248, 4
        %s250 = scalar_lea.vmem %s0, %s249
        %s251 = smul.u32 2, %s24
        %s252 = smul.u32 2, %s24
        %p253 = scmp.lt.s32.totalorder %s252, 1
        %s254 = scalar_select %p253, %s252, 1
        %s255 = smul.addr %s254, 8
        %s256 = scalar_lea.vmem %s3, %s255
        %s257 = smul.u32 2, %s24
        %s258 = smul.u32 2, %s24
        %p260 = scmp.lt.s32.totalorder %s25, 0
        %s261 = ssub.s32 0, %s25
        %s262 = scalar_select %p260, %s261, %s25
        %s263 = sand.u32 %s262, 1
        %s264 = ssub.s32 0, %s263
        %s265 = scalar_select %p260, %s264, %s263
        %s266 = ssub.s32 1, %s265
        %p267 = scmp.eq.s32.totalorder %s25, 0
        %p268 = scmp.eq.s32.totalorder %s26, 0
        %p269 = pnand %p267, %p268
        %p270 = pneg %p269
        // Predicated region
        $region41: #{tpu_custom_call.1} parent=35 // pred_check
          _
        $region42: #{tpu_custom_call.1} parent=35 // pred_check_branch
          %272 = sbr.rel (%p269) target = $region44
        $region43: #{tpu_custom_call.1} parent=35 // pred_region
          %v273 = vld [vmem:[%s250] sm:$0xf]
          %v274 = vld [vmem:[%s250 + $0x4] sm:$0xf]
          %v277 = vunpack.c.l.b16 %v273
          %v278 = vunpack.c.l.b16 %v274
          %v279 = vpack.c.b16 %v278, %v277
          %281 = vst [vmem:[#allocation2] sm:$0xff] %v279
        $region44: #{tpu_custom_call.1} parent=35 // pred_fallthru
          _
        %s282 = smul.addr %s265, 8
        %s283 = scalar_lea.vmem [#allocation2], %s282
        %v284 = vld [vmem:[%s283] sm:$0xff]
        %s285 = smul.u32 %s25, 16
        %s286 = smul.addr %s285, 4
        %s287 = scalar_lea.vmem [#allocation3], %s286
        %v288 = vld [vmem:[%s287] sm:$0xf]
        %v289 = vld [vmem:[%s287 + $0x4] sm:$0xf]
        %v290 = vld [vmem:[%s287 + $0x8] sm:$0xf]
        %v291 = vld [vmem:[%s287 + $0xc] sm:$0xf]
        %v292 = vld [vmem:[%s287 + $0x10] sm:$0xf]
        %v293 = vld [vmem:[%s287 + $0x14] sm:$0xf]
        %v294 = vld [vmem:[%s287 + $0x18] sm:$0xf]
        %v295 = vld [vmem:[%s287 + $0x1c] sm:$0xf]
        %v296 = vld [vmem:[%s287 + $0x20] sm:$0xf]
        %v297 = vld [vmem:[%s287 + $0x24] sm:$0xf]
        %v298 = vld [vmem:[%s287 + $0x28] sm:$0xf]
        %v299 = vld [vmem:[%s287 + $0x2c] sm:$0xf]
        %v300 = vld [vmem:[%s287 + $0x30] sm:$0xf]
        %v301 = vld [vmem:[%s287 + $0x34] sm:$0xf]
        %v302 = vld [vmem:[%s287 + $0x38] sm:$0xf]
        %v303 = vld [vmem:[%s287 + $0x3c] sm:$0xf]
        %s304 = scalar_lea.vmem %s2, %s25
        %v305 = vld [vmem:[%s304] sm:$0x1]
        %v307 = vlaneseq
        %v308 = vshrl.u32 %v307, 7
        %v309 = vsub.s32 0, %v308
        %v310 = vrot.slane %v305, %v309
        %v328 = vunpack.c.l.b16 %v288
        %v329 = vunpack.c.l.b16 %v289
        %v330 = vunpack.c.l.b16 %v290
        %v331 = vunpack.c.l.b16 %v291
        %v332 = vunpack.c.l.b16 %v292
        %v333 = vunpack.c.l.b16 %v293
        %v334 = vunpack.c.l.b16 %v294
        %v335 = vunpack.c.l.b16 %v295
        %v336 = vunpack.c.l.b16 %v296
        %v337 = vunpack.c.l.b16 %v297
        %v338 = vunpack.c.l.b16 %v298
        %v339 = vunpack.c.l.b16 %v299
        %v340 = vunpack.c.l.b16 %v300
        %v341 = vunpack.c.l.b16 %v301
        %v342 = vunpack.c.l.b16 %v302
        %v343 = vunpack.c.l.b16 %v303
        %v344 = vpack.c.b16 %v329, %v328
        %v345 = vpack.c.b16 %v331, %v330
        %v346 = vpack.c.b16 %v333, %v332
        %v347 = vpack.c.b16 %v335, %v334
        %v348 = vpack.c.b16 %v337, %v336
        %v349 = vpack.c.b16 %v339, %v338
        %v350 = vpack.c.b16 %v341, %v340
        %v351 = vpack.c.b16 %v343, %v342
        %360 = vmatprep.subr.bf16.mxu0 0
        %361 = vmatpush1.bf16.msra.mxu0 %v344
        %362 = vmatprep.subr.bf16.mxu0 0
        %363 = vmatpush1.bf16.msra.mxu0 %v345
        %364 = vmatprep.subr.bf16.mxu0 0
        %365 = vmatpush1.bf16.msra.mxu0 %v346
        %366 = vmatprep.subr.bf16.mxu0 0
        %367 = vmatpush1.bf16.msra.mxu0 %v347
        %368 = vmatprep.subr.bf16.mxu0 0
        %369 = vmatpush1.bf16.msra.mxu0 %v348
        %370 = vmatprep.subr.bf16.mxu0 0
        %371 = vmatpush1.bf16.msra.mxu0 %v349
        %372 = vmatprep.subr.bf16.mxu0 0
        %373 = vmatpush1.bf16.msra.mxu0 %v350
        %374 = vmatprep.subr.bf16.mxu0 0
        %375 = vmatpush1.bf16.msra.mxu0 %v351
        %376 = vmatprep.subr.bf16.mxu0 0
        %377 = vmatpush1.bf16.msra.mxu0 0
        %378 = vmatprep.subr.bf16.mxu0 0
        %379 = vmatpush1.bf16.msra.mxu0 0
        %380 = vmatprep.subr.bf16.mxu0 0
        %381 = vmatpush1.bf16.msra.mxu0 0
        %382 = vmatprep.subr.bf16.mxu0 0
        %383 = vmatpush1.bf16.msra.mxu0 0
        %384 = vmatprep.subr.bf16.mxu0 0
        %385 = vmatpush1.bf16.msra.mxu0 0
        %386 = vmatprep.subr.bf16.mxu0 0
        %387 = vmatpush1.bf16.msra.mxu0 0
        %388 = vmatprep.subr.bf16.mxu0 0
        %389 = vmatpush1.bf16.msra.mxu0 0
        %390 = vmatprep.subr.bf16.mxu0 0
        %391 = vmatpush1.bf16.msra.mxu0 0
        %392 = vmatprep.mubr.bf16.mxu0 0
        %393 = vmatmul.mubr.bf16.gmra.mrb[0].mxu0 %v284
        %v394 = vpop.f32.mrb[0].mxu0
        %v395 = vadd.f32 %v310, %v394
        %v396 = vpop.f32.mrb[0].mxu0
        %v397 = vpop.f32.mrb[0].mxu0
        %v398 = vadd.f32 %v310, %v397
        %v399 = vpop.f32.mrb[0].mxu0
        %400 = vdwg.mxu0
        %v401 = vmax.f32 %v395, 0.0
        %v402 = vmax.f32 %v398, 0.0
        %v403 = vld [vmem:[%s256] sm:$0xff]
        %v404 = vld [vmem:[%s256 + $0x8] sm:$0xff]
        %406 = vset.pattern.permute.xlu0 0
        %407 = vperm.xlu0 %406, %v403
        %v408 = vpop.permute.xlu0 %407
        %411 = vset.pattern.permute.xlu0 0
        %412 = vperm.xlu0 %411, %v404
        %v413 = vpop.permute.xlu0 %412
        %v415 = vmul.f32 %v401, %v408
        %v416 = vmul.f32 %v402, %v413
        %v417 = vpack.c.bf16 %v416, %v415
        %v419 = vunpack.c.l.b16 %v417
        %v420 = vunpack.c.h.b16 %v417
        %v421 = vpack.c.b16 %v419, %v419
        %v422 = vpack.c.b16 %v420, %v420
        %425 = vst [vmem:[%s245] sm:$0xf] %v421
        %426 = vst [vmem:[%s245 + $0x4] sm:$0xf] %v422
        %p427 = scmp.lt.s32.totalorder %s25, 2
        // Predicated region
        $region45: #{tpu_custom_call.1} parent=35 // pred_check
          %p428 = pneg %p427
        $region46: #{tpu_custom_call.1} parent=35 // pred_check_branch
          %430 = sbr.rel (%p428) target = $region48
        $region47: #{tpu_custom_call.1} parent=35 // pred_region
          %s431 = smul.addr %s266, 8
          %s432 = scalar_lea.vmem [#allocation2], %s431
          %433 = vst [vmem:[%s432] sm:$0xff] %v417
        $region48: #{tpu_custom_call.1} parent=35 // pred_fallthru
          _
        %s434 = sand.u32 %s144, 1
        %s435 = scalar_lea.sflag [#allocation5], %s434
        %s436 = sand.u32 %s144, 1
        %s437 = smul.addr %s436, 8
        %s438 = scalar_lea.vmem [#allocation6], %s437
        // Predicated region
        $region49: #{tpu_custom_call.1} parent=35 // pred_check
          %p439 = pneg %p154
        $region50: #{tpu_custom_call.1} parent=35 // pred_check_branch
          %441 = sbr.rel (%p439) target = $region52
        $region51: #{tpu_custom_call.1} parent=35 // pred_region
          %s442 = smul.u32 2, %s24
          %s444 = ssub.s32 128, 128
          %445 = vsyncadd %s435, %s444
          %s446 = sadd.s32 %s26, %s442
          %s447 = smul.addr %s25, 2
          %s448 = sadd.s32 %s446, %s447
          %s449 = smul.addr %s448, 64
          %s450 = scalar_lea.hbm %s4, %s449
          %s451 = sshll.u32 %s438, 4
          %s452 = int_to_ptr.vmem [resolvable:$true] %s451
          %457 = dma.vmem_to_hbm [thread:$0]  %s452, 128, %s450, %s435, 64, 64, 4
        $region52: #{tpu_custom_call.1} parent=35 // pred_fallthru
          _
      $region36: #{tpu_custom_call.1} parent=5 // pred_fallthru
        _
      %p458 = scmp.le.s32.totalorder 2, %s14
      // Predicated region
      $region53: #{tpu_custom_call.1} parent=5 // pred_check
        %p459 = pneg %p458
      $region54: #{tpu_custom_call.1} parent=5 // pred_check_branch
        %461 = sbr.rel (%p459) target = $region56
      $region55: #{tpu_custom_call.1} parent=5 // pred_region
        %s462 = ssub.s32 %s14, 2
        // Predicated region
        $region57: #{tpu_custom_call.1} parent=55 // pred_check
          %p463 = pneg %p160
        $region58: #{tpu_custom_call.1} parent=55 // pred_check_branch
          %465 = sbr.rel (%p463) target = $region60
        $region59: #{tpu_custom_call.1} parent=55 // pred_region
          %s466 = sand.u32 %s145, 1
          %s467 = scalar_lea.sflag [#allocation5], %s466
          %s468 = sand.u32 %s145, 1
          %s469 = smul.addr %s468, 8
          %s470 = scalar_lea.vmem [#allocation6], %s469
          %471 = dma.done %s467, 128
        $region60: #{tpu_custom_call.1} parent=55 // pred_fallthru
          _
      $region56: #{tpu_custom_call.1} parent=5 // pred_fallthru
        _
    $region6: #{tpu_custom_call.1} parent=1 // loop_footer
      %s18 = sadd.s32 1, %s14
    $region7: #{tpu_custom_call.1} parent=1 // loop_footer_branch
      %13 = sbr.rel target = $region3
    $region8: #{tpu_custom_call.1} parent=1 // loop_exit
      _
    %472 = vsyncpa [#allocation4], 1
    %s473 = scalar_lea.sflag [#allocation4], 1
    %474 = vsyncpa %s473, 1
    %475 = vsyncpa [#allocation5], 1
    %s476 = scalar_lea.sflag [#allocation5], 1
    %477 = vsyncpa %s476, 1

</llo_original>
